<compile_context>
chip_gen: v5e
topology: v5e:2x2
jax: 0.10.0
libtpu: 0.0.40
codegen_flags: <defaults>
</compile_context>

<pallas_src>
import functools

import jax
import jax.numpy as jnp
from jax.experimental import pallas as pl
from jax.experimental.pallas import tpu as pltpu


# ----------------------------- Pallas kernel --------------------------------
def _pinn_mlp_kernel(num_layers, d_in, vpu_first_layer, in_ref, *refs):
    """Full MLP forward for one batch tile (batch on the lane axis).

    refs = (w0, b0, w1, b1, ..., w_{L-1}, b_{L-1}, out_ref)
      in_ref : [d_in, tile_n]
      w_i    : [out_i, in_i]   (PyTorch nn.Linear weight layout; bf16 or f32)
      b_i    : [out_i, 1]      (f32, broadcast over the lane/batch axis)
    Layer i:  h = w_i @ h + b_i ; tanh after every layer but the last.
    """
    out_ref = refs[-1]
    params = refs[:-1]

    h = in_ref[...].astype(jnp.float32)              # [d_in, tile_n]

    start = 0
    if vpu_first_layer:
        # Layer 0 has a tiny contraction (K = d_in): do it as d_in VPU
        # broadcast FMAs in f32 instead of an almost-empty MXU dot.
        w0 = params[0][...].astype(jnp.float32)      # [H, d_in]
        b0 = params[1][...]                          # [H, 1]
        acc = b0 + w0[:, 0:1] * h[0:1, :]            # [H, tile_n]
        for j in range(1, d_in):
            acc = acc + w0[:, j:j + 1] * h[j:j + 1, :]
        h = jnp.tanh(acc) if num_layers > 1 else acc
        start = 1

    for i in range(start, num_layers):
        w = params[2 * i][...]                       # [out, in] (bf16 or f32)
        b = params[2 * i + 1][...]                   # [out, 1]  (f32)
        # bf16 operands -> 1-pass MXU on v6e/v7x; f32 accumulate either way.
        h = jnp.dot(w, h.astype(w.dtype),
                    preferred_element_type=jnp.float32) + b
        if i < num_layers - 1:                       # nn.Tanh() after hidden Linear
            h = jnp.tanh(h)                          # EUP, full 128-lane occupancy

    out_ref[...] = h.astype(out_ref.dtype)           # lane-dense [d_out, tile_n]


# ------------------------------ wrapper --------------------------------------
def _choose_tile_n(n, max_tile=8192):
    """Batch-adaptive tile: big tiles to amortize per-step overhead, but keep
    at least 2 grid steps when the batch allows so v7x megacore is used."""
    n128 = pl.cdiv(n, 128) * 128
    if n128 <= 256:
        return int(n128)                             # tiny batch: one tile
    half = pl.cdiv(pl.cdiv(n128, 2), 128) * 128
    return int(min(max_tile, half))


def pinn_forward(x, t, weights, biases, *, tile_n=None, mxu_dtype=jnp.bfloat16):
    """Runs the PINN MLP on TPU via pallas_call, tiled over the batch (lane) axis.

    x, t: [N, dx], [N, dt]  ->  returns [N, d_out] (same semantics as PINN.forward).
    """
    assert x.shape[0] == t.shape[0]
    n = x.shape[0]
    d_in = x.shape[1] + t.shape[1]
    d_out = weights[-1].shape[0]
    num_layers = len(weights)

    # torch.cat([x, t], dim=1) with batch on the 128-lane axis.  When
    # dx = dt = 1 the "transpose" is just a reshape (no relayout HLO).
    if x.shape[1] == 1 and t.shape[1] == 1:
        inp = jnp.concatenate([x.reshape(1, n), t.reshape(1, n)], axis=0)
    else:
        inp = jnp.concatenate([x, t], axis=1).T      # [d_in, N]

    if tile_n is None:
        tile_n = _choose_tile_n(n)
    n_pad = pl.cdiv(n, tile_n) * tile_n
    if n_pad != n:
        # Padded lanes are independent zero columns; sliced off below.
        inp = jnp.pad(inp, ((0, 0), (0, n_pad - n)))

    vpu_first_layer = d_in <= 8
    kernel = functools.partial(_pinn_mlp_kernel, num_layers, d_in, vpu_first_layer)

    in_specs = [pl.BlockSpec((d_in, tile_n), lambda i: (0, i))]
    param_args = []
    flops = 0
    transcendentals = 0
    param_bytes = 0
    for li, (w, b) in enumerate(zip(weights, biases)):
        use_mxu = not (vpu_first_layer and li == 0)
        wk = w.astype(mxu_dtype) if use_mxu else w   # bf16 MXU operands on v6e/v7x
        # Tiny parameters: fully resident, constant block index (DMA'd once).
        in_specs.append(pl.BlockSpec(wk.shape, lambda i: (0, 0)))
        in_specs.append(pl.BlockSpec(b.shape, lambda i: (0, 0)))
        param_args.extend([wk, b])
        flops += 2 * n * w.shape[0] * w.shape[1]
        if li < num_layers - 1:
            transcendentals += n * w.shape[0]
        param_bytes += wk.size * wk.dtype.itemsize + b.size * b.dtype.itemsize

    bytes_accessed = (inp.size * inp.dtype.itemsize
                      + n_pad * d_out * x.dtype.itemsize
                      + param_bytes)

    out_t = pl.pallas_call(
        kernel,
        out_shape=jax.ShapeDtypeStruct((d_out, n_pad), x.dtype),
        grid=(n_pad // tile_n,),
        in_specs=in_specs,
        out_specs=pl.BlockSpec((d_out, tile_n), lambda i: (0, i)),
        compiler_params=pltpu.CompilerParams(
            dimension_semantics=("parallel",),
        ),
        cost_estimate=pl.CostEstimate(
            flops=flops,
            transcendentals=transcendentals,
            bytes_accessed=bytes_accessed,
        ),
    )(inp, *param_args)

    return out_t[:, :n].T                            # back to [N, d_out]


# ------------------------- deterministic parameters ---------------------------
def init_pinn_params(key, input_size, hidden_size, output_size, hidden_layers):
    """Mirrors PINN._init_weights: xavier_normal_ weights, zero biases.

    Weights are kept in the PyTorch Linear layout [out, in]; biases as [out, 1].
    """
    dims = [input_size] + [hidden_size] * (hidden_layers + 1) + [output_size]
    weights, biases = [], []
    for fan_in, fan_out in zip(dims[:-1], dims[1:]):
        key, sub = jax.random.split(key)
        std = (2.0 / (fan_in + fan_out)) ** 0.5      # xavier normal, gain=1
        w = std * jax.random.normal(sub, (fan_out, fan_in), dtype=jnp.float32)
        b = jnp.zeros((fan_out, 1), dtype=jnp.float32)
        weights.append(w)
        biases.append(b)
    return weights, biases


def pinn_reference(x, t, weights, biases):
    """Plain-JAX f32 reference for correctness checking (PyTorch layout math)."""
    h = jnp.concatenate([x, t], axis=1)
    for i, (w, b) in enumerate(zip(weights, biases)):
        h = h @ w.T + b.T
        if i < len(weights) - 1:
            h = jnp.tanh(h)
    return h


# --------------------------------- main ---------------------------------------
if __name__ == "__main__":
    # PINN(input_size=2, hidden_size=32, output_size=1, hidden_layers=2)
    input_size, hidden_size, output_size, hidden_layers = 2, 32, 1, 2
    batch = 2048          # adaptive tile -> 2 grid steps of 1024 lanes

    key = jax.random.PRNGKey(0)
    k_params, k_x, k_t = jax.random.split(key, 3)

    weights, biases = init_pinn_params(
        k_params, input_size, hidden_size, output_size, hidden_layers
    )

    x = jax.random.normal(k_x, (batch, 1), dtype=jnp.float32)
    t = jax.random.normal(k_t, (batch, 1), dtype=jnp.float32)

    out = pinn_forward(x, t, weights, biases)
    out = jax.block_until_ready(out)

    ref = pinn_reference(x, t, weights, biases)
    assert out.shape == (batch, output_size), out.shape
    # Tolerance covers bf16 MXU operands (f32 accumulate) vs the f32 reference
    # plus accumulation-order differences of the transposed (W @ H) layout.
    assert jnp.allclose(out, ref, atol=3e-2, rtol=3e-2), (
        "Pallas kernel output diverges from JAX reference: "
        f"max|diff|={float(jnp.max(jnp.abs(out - ref)))}"
    )

    print("KERNEL_OK")
</pallas_src>

<mosaic_0001>
module attributes {stable_mosaic.version = 11 : i64} {
  func.func @_pinn_mlp_kernel(%arg0: i32, %arg1: memref<2x1024xf32, #tpu.memory_space<vmem>>, %arg2: memref<32x2xf32, #tpu.memory_space<vmem>>, %arg3: memref<32x1xf32, #tpu.memory_space<vmem>>, %arg4: memref<32x32xbf16, #tpu.memory_space<vmem>>, %arg5: memref<32x1xf32, #tpu.memory_space<vmem>>, %arg6: memref<32x32xbf16, #tpu.memory_space<vmem>>, %arg7: memref<32x1xf32, #tpu.memory_space<vmem>>, %arg8: memref<1x32xbf16, #tpu.memory_space<vmem>>, %arg9: memref<1x1xf32, #tpu.memory_space<vmem>>, %arg10: memref<1x1024xf32, #tpu.memory_space<vmem>>) attributes {dimension_semantics = [#tpu.dimension_semantics<parallel>], iteration_bounds = array<i64: 2>, scalar_prefetch = 0 : i64, scratch_operands = 0 : i64, tpu.core_type = #tpu.core_type<tc>, window_params = [{transform_indices = @transform_0, window_bounds = array<i64: 2, 1024>}, {pipeline_mode = #tpu.pipeline_mode<synchronous>, transform_indices = @transform_1, window_bounds = array<i64: 32, 2>}, {pipeline_mode = #tpu.pipeline_mode<synchronous>, transform_indices = @transform_2, window_bounds = array<i64: 32, 1>}, {pipeline_mode = #tpu.pipeline_mode<synchronous>, transform_indices = @transform_3, window_bounds = array<i64: 32, 32>}, {pipeline_mode = #tpu.pipeline_mode<synchronous>, transform_indices = @transform_4, window_bounds = array<i64: 32, 1>}, {pipeline_mode = #tpu.pipeline_mode<synchronous>, transform_indices = @transform_5, window_bounds = array<i64: 32, 32>}, {pipeline_mode = #tpu.pipeline_mode<synchronous>, transform_indices = @transform_6, window_bounds = array<i64: 32, 1>}, {pipeline_mode = #tpu.pipeline_mode<synchronous>, transform_indices = @transform_7, window_bounds = array<i64: 1, 32>}, {pipeline_mode = #tpu.pipeline_mode<synchronous>, transform_indices = @transform_8, window_bounds = array<i64: 1, 1>}, {transform_indices = @transform_9, window_bounds = array<i64: 1, 1024>}]} {
    %c0 = arith.constant 0 : index
    %c0_0 = arith.constant 0 : index
    %0 = vector.load %arg1[%c0, %c0_0] : memref<2x1024xf32, #tpu.memory_space<vmem>>, vector<2x1024xf32>
    %c0_1 = arith.constant 0 : index
    %c0_2 = arith.constant 0 : index
    %1 = vector.load %arg2[%c0_1, %c0_2] : memref<32x2xf32, #tpu.memory_space<vmem>>, vector<32x2xf32>
    %c0_3 = arith.constant 0 : index
    %c0_4 = arith.constant 0 : index
    %2 = vector.load %arg3[%c0_3, %c0_4] : memref<32x1xf32, #tpu.memory_space<vmem>>, vector<32x1xf32>
    %3 = vector.extract_strided_slice %1 {offsets = [0, 0], sizes = [32, 1], strides = [1, 1]} : vector<32x2xf32> to vector<32x1xf32>
    %4 = vector.extract_strided_slice %0 {offsets = [0, 0], sizes = [1, 1024], strides = [1, 1]} : vector<2x1024xf32> to vector<1x1024xf32>
    %5 = vector.broadcast %3 : vector<32x1xf32> to vector<32x1024xf32>
    %6 = vector.broadcast %4 : vector<1x1024xf32> to vector<32x1024xf32>
    %7 = arith.mulf %5, %6 : vector<32x1024xf32>
    %8 = vector.broadcast %2 : vector<32x1xf32> to vector<32x1024xf32>
    %9 = arith.addf %8, %7 : vector<32x1024xf32>
    %10 = vector.extract_strided_slice %1 {offsets = [0, 1], sizes = [32, 1], strides = [1, 1]} : vector<32x2xf32> to vector<32x1xf32>
    %11 = vector.extract_strided_slice %0 {offsets = [1, 0], sizes = [1, 1024], strides = [1, 1]} : vector<2x1024xf32> to vector<1x1024xf32>
    %12 = vector.broadcast %10 : vector<32x1xf32> to vector<32x1024xf32>
    %13 = vector.broadcast %11 : vector<1x1024xf32> to vector<32x1024xf32>
    %14 = arith.mulf %12, %13 : vector<32x1024xf32>
    %15 = arith.addf %9, %14 : vector<32x1024xf32>
    %16 = math.tanh %15 : vector<32x1024xf32>
    %c0_5 = arith.constant 0 : index
    %c0_6 = arith.constant 0 : index
    %17 = vector.load %arg4[%c0_5, %c0_6] : memref<32x32xbf16, #tpu.memory_space<vmem>>, vector<32x32xbf16>
    %c0_7 = arith.constant 0 : index
    %c0_8 = arith.constant 0 : index
    %18 = vector.load %arg5[%c0_7, %c0_8] : memref<32x1xf32, #tpu.memory_space<vmem>>, vector<32x1xf32>
    %19 = arith.truncf %16 : vector<32x1024xf32> to vector<32x1024xbf16>
    %cst = arith.constant dense<0.000000e+00> : vector<32x1024xf32>
    %20 = tpu.matmul %17, %19, %cst {dimension_numbers = #tpu.dot_dimension_numbers<[1], [0], [0], [1], [0, 0, 1, 1], [], []>} : vector<32x32xbf16>, vector<32x1024xbf16>, vector<32x1024xf32> -> vector<32x1024xf32>
    %21 = vector.broadcast %18 : vector<32x1xf32> to vector<32x1024xf32>
    %22 = arith.addf %20, %21 : vector<32x1024xf32>
    %23 = math.tanh %22 : vector<32x1024xf32>
    %c0_9 = arith.constant 0 : index
    %c0_10 = arith.constant 0 : index
    %24 = vector.load %arg6[%c0_9, %c0_10] : memref<32x32xbf16, #tpu.memory_space<vmem>>, vector<32x32xbf16>
    %c0_11 = arith.constant 0 : index
    %c0_12 = arith.constant 0 : index
    %25 = vector.load %arg7[%c0_11, %c0_12] : memref<32x1xf32, #tpu.memory_space<vmem>>, vector<32x1xf32>
    %26 = arith.truncf %23 : vector<32x1024xf32> to vector<32x1024xbf16>
    %cst_13 = arith.constant dense<0.000000e+00> : vector<32x1024xf32>
    %27 = tpu.matmul %24, %26, %cst_13 {dimension_numbers = #tpu.dot_dimension_numbers<[1], [0], [0], [1], [0, 0, 1, 1], [], []>} : vector<32x32xbf16>, vector<32x1024xbf16>, vector<32x1024xf32> -> vector<32x1024xf32>
    %28 = vector.broadcast %25 : vector<32x1xf32> to vector<32x1024xf32>
    %29 = arith.addf %27, %28 : vector<32x1024xf32>
    %30 = math.tanh %29 : vector<32x1024xf32>
    %c0_14 = arith.constant 0 : index
    %c0_15 = arith.constant 0 : index
    %31 = vector.load %arg8[%c0_14, %c0_15] : memref<1x32xbf16, #tpu.memory_space<vmem>>, vector<1x32xbf16>
    %c0_16 = arith.constant 0 : index
    %c0_17 = arith.constant 0 : index
    %32 = vector.load %arg9[%c0_16, %c0_17] : memref<1x1xf32, #tpu.memory_space<vmem>>, vector<1x1xf32>
    %33 = arith.truncf %30 : vector<32x1024xf32> to vector<32x1024xbf16>
    %cst_18 = arith.constant dense<0.000000e+00> : vector<1x1024xf32>
    %34 = tpu.matmul %31, %33, %cst_18 {dimension_numbers = #tpu.dot_dimension_numbers<[1], [0], [0], [1], [0, 0, 1, 1], [], []>} : vector<1x32xbf16>, vector<32x1024xbf16>, vector<1x1024xf32> -> vector<1x1024xf32>
    %35 = vector.broadcast %32 : vector<1x1xf32> to vector<1x1024xf32>
    %36 = arith.addf %34, %35 : vector<1x1024xf32>
    %c0_19 = arith.constant 0 : index
    %c0_20 = arith.constant 0 : index
    %37 = vector.load %arg10[%c0_19, %c0_20] : memref<1x1024xf32, #tpu.memory_space<vmem>>, vector<1x1024xf32>
    tpu.vector_store %arg10[%c0_19, %c0_20], %36 {strides = array<i32>} : memref<1x1024xf32, #tpu.memory_space<vmem>>, vector<1x1024xf32>,
    return
  }
  func.func @transform_0(%arg0: i32) -> (i32, i32) {
    %c0_i32 = arith.constant 0 : i32
    %c0_i32_0 = arith.constant 0 : i32
    return %c0_i32, %arg0 : i32, i32
  }
  func.func @transform_1(%arg0: i32) -> (i32, i32) {
    %c0_i32 = arith.constant 0 : i32
    %c0_i32_0 = arith.constant 0 : i32
    %c0_i32_1 = arith.constant 0 : i32
    return %c0_i32, %c0_i32_0 : i32, i32
  }
  func.func @transform_2(%arg0: i32) -> (i32, i32) {
    %c0_i32 = arith.constant 0 : i32
    %c0_i32_0 = arith.constant 0 : i32
    %c0_i32_1 = arith.constant 0 : i32
    return %c0_i32, %c0_i32_0 : i32, i32
  }
  func.func @transform_3(%arg0: i32) -> (i32, i32) {
    %c0_i32 = arith.constant 0 : i32
    %c0_i32_0 = arith.constant 0 : i32
    %c0_i32_1 = arith.constant 0 : i32
    return %c0_i32, %c0_i32_0 : i32, i32
  }
  func.func @transform_4(%arg0: i32) -> (i32, i32) {
    %c0_i32 = arith.constant 0 : i32
    %c0_i32_0 = arith.constant 0 : i32
    %c0_i32_1 = arith.constant 0 : i32
    return %c0_i32, %c0_i32_0 : i32, i32
  }
  func.func @transform_5(%arg0: i32) -> (i32, i32) {
    %c0_i32 = arith.constant 0 : i32
    %c0_i32_0 = arith.constant 0 : i32
    %c0_i32_1 = arith.constant 0 : i32
    return %c0_i32, %c0_i32_0 : i32, i32
  }
  func.func @transform_6(%arg0: i32) -> (i32, i32) {
    %c0_i32 = arith.constant 0 : i32
    %c0_i32_0 = arith.constant 0 : i32
    %c0_i32_1 = arith.constant 0 : i32
    return %c0_i32, %c0_i32_0 : i32, i32
  }
  func.func @transform_7(%arg0: i32) -> (i32, i32) {
    %c0_i32 = arith.constant 0 : i32
    %c0_i32_0 = arith.constant 0 : i32
    %c0_i32_1 = arith.constant 0 : i32
    return %c0_i32, %c0_i32_0 : i32, i32
  }
  func.func @transform_8(%arg0: i32) -> (i32, i32) {
    %c0_i32 = arith.constant 0 : i32
    %c0_i32_0 = arith.constant 0 : i32
    %c0_i32_1 = arith.constant 0 : i32
    return %c0_i32, %c0_i32_0 : i32, i32
  }
  func.func @transform_9(%arg0: i32) -> (i32, i32) {
    %c0_i32 = arith.constant 0 : i32
    %c0_i32_0 = arith.constant 0 : i32
    return %c0_i32, %arg0 : i32, i32
  }
}

</mosaic_0001>

<llo_original>
// kernel: tpu_custom_call.1
$region0: #{tpu_custom_call.1}
  #allocation0 [shape = 'u32[]', space=smem, size = 0x4, offset = 0x4, fixed_abs, tag = 'smem constant byte address 0x4 - core index']
  #allocation1 [shape = 'u32[72,128]{1,0:T(1,128)}', space=vmem, size = 0x9000, scoped, tag = 'internal scratch']
  #allocation2 [shape = 'f32[1,1]{1,0:T(1,128)S(1)}', space=vmem, size = 0x200, scoped, tag = 'scoped memory for tpu_custom_call.1']
  %s0 = inlined_call_operand.vmem [shape: f32[2,2048], index: 0, kind: input, shape index: {}]
  %s1 = inlined_call_operand.vmem [shape: f32[32,2], index: 1, kind: input, shape index: {}]
  %s2 = inlined_call_operand.vmem [shape: f32[32,1], index: 2, kind: input, shape index: {}]
  %s3 = inlined_call_operand.vmem [shape: bf16[32,32], index: 3, kind: input, shape index: {}]
  %s4 = inlined_call_operand.vmem [shape: f32[32,1], index: 4, kind: input, shape index: {}]
  %s5 = inlined_call_operand.vmem [shape: bf16[32,32], index: 5, kind: input, shape index: {}]
  %s6 = inlined_call_operand.vmem [shape: f32[32,1], index: 6, kind: input, shape index: {}]
  %s7 = inlined_call_operand.vmem [shape: bf16[1,32], index: 7, kind: input, shape index: {}]
  %s8 = inlined_call_operand.<no memory space> [shape: f32[1,1], index: 8, kind: input, shape index: {}]
  %s9 = inlined_call_operand.hbm [shape: f32[1,2048], index: 9, kind: output, shape index: {}]
  %s10 = sld [smem:[#allocation0]]
  $region69: #{tpu_custom_call.1} parent=0
    _
  %s12 = ssub.s32 1, %s10
  %s13 = scalar_select 0, %s12, %s10
  %v14 = vstv %s8
  %15 = vst [vmem:[#allocation2] sm:$0x1] %v14
  $region1: #{tpu_custom_call.1} parent=0
    #allocation3 [shape = 'u8[8192]{0}', space=vmem, size = 0x2000, scoped, tag = 'output window, operand 0']
    #allocation4 [shape = 's32[2]{0}', space=sflag, size = 0x8, scoped, tag = 'scoped memory for tpu_custom_call.1']
    %16 = vsyncpa [#allocation4], 0
    %s17 = scalar_lea.sflag [#allocation4], 1
    %18 = vsyncpa %s17, 0
    loop: start=0, step=1, limit=4
    $region2: #{tpu_custom_call.1} parent=1 // loop_pre_header
      _
    $region3: #{tpu_custom_call.1} parent=1 // loop_header
      %s20 = sphi 0, %s24
      %p21 = scmp.ge.s32.totalorder %s20, 4
      %s30 = sphi 0, %s32
      %s33 = sphi 0, %s30
      %s34 = sphi 0, %s33
      %s50 = sphi 0, %s34
      %s54 = sphi 0, %s54
      %s56 = sphi 0, %s54
      %s57 = sphi 0, %s56
      %s71 = sphi 0, %s57
      %s75 = sphi 0, %s75
      %s77 = sphi 0, %s75
      %s78 = sphi 0, %s77
      %s92 = sphi 0, %s78
      %s96 = sphi 0, %s96
      %s98 = sphi 0, %s96
      %s99 = sphi 0, %s98
      %s113 = sphi 0, %s99
      %s117 = sphi 0, %s117
      %s119 = sphi 0, %s117
      %s120 = sphi 0, %s119
      %s134 = sphi 0, %s120
      %s138 = sphi 0, %s138
      %s140 = sphi 0, %s138
      %s141 = sphi 0, %s140
      %s155 = sphi 0, %s141
      %s159 = sphi 0, %s159
      %s161 = sphi 0, %s159
      %s162 = sphi 0, %s161
      %s176 = sphi 0, %s162
      %s180 = sphi 0, %s180
      %s182 = sphi 0, %s180
      %s183 = sphi 0, %s182
      %s197 = sphi 0, %s183
      %s201 = sphi 0, %s201
      %s203 = sphi 0, %s201
      %s204 = sphi 0, %s203
      %s218 = sphi 0, %s204
      %s224 = sphi 0, %s226
      %s227 = sphi 0, %s224
      %s228 = sphi 0, %s227
      %s244 = sphi 0, %s228
    $region4: #{tpu_custom_call.1} parent=1 // loop_header_branch
      %23 = sbr.rel (%p21) target = $region8
    $region5: #{tpu_custom_call.1} parent=1 // loop_body
      %s25 = ssub.s32 %s20, 1
      %s26 = ssub.s32 %s20, 2
      %s27 = sadd.s32 %s20, 1
      %s28 = ssub.s32 %s20, %s27
      %p29 = scmp.eq.s32.totalorder %s28, 0
      %s31 = sadd.s32 %s30, 1
      %s32 = scalar_select %p29, %s30, %s31
      %p35 = pneg %p29
      %p36 = scmp.eq.s32.totalorder %s20, 1
      %p37 = por %p35, %p36
      %p38 = scmp.ne.s32.totalorder %s30, %s33
      %p39 = scmp.eq.s32.totalorder %s20, 0
      %p40 = por %p38, %p39
      %p41 = scmp.ne.s32.totalorder %s30, %s33
      %p42 = scmp.eq.s32.totalorder %s25, 1
      %p43 = por %p41, %p42
      %p44 = scmp.ne.s32.totalorder %s33, %s34
      %p45 = scmp.eq.s32.totalorder %s25, 0
      %p46 = por %p44, %p45
      %p47 = scmp.ne.s32.totalorder %s33, %s34
      %p48 = scmp.eq.s32.totalorder %s26, 1
      %p49 = por %p47, %p48
      %p51 = scmp.ne.s32.totalorder %s34, %s50
      %p52 = scmp.eq.s32.totalorder %s26, 0
      %p53 = por %p51, %p52
      %s55 = sadd.s32 %s54, 1
      %p58 = scmp.eq.s32.totalorder %s20, 1
      %p59 = scmp.ne.s32.totalorder %s54, %s56
      %p60 = scmp.eq.s32.totalorder %s20, 0
      %p61 = por %p59, %p60
      %p62 = scmp.ne.s32.totalorder %s54, %s56
      %p63 = scmp.eq.s32.totalorder %s25, 1
      %p64 = por %p62, %p63
      %p65 = scmp.ne.s32.totalorder %s56, %s57
      %p66 = scmp.eq.s32.totalorder %s25, 0
      %p67 = por %p65, %p66
      %p68 = scmp.ne.s32.totalorder %s56, %s57
      %p69 = scmp.eq.s32.totalorder %s26, 1
      %p70 = por %p68, %p69
      %p72 = scmp.ne.s32.totalorder %s57, %s71
      %p73 = scmp.eq.s32.totalorder %s26, 0
      %p74 = por %p72, %p73
      %s76 = sadd.s32 %s75, 1
      %p79 = scmp.eq.s32.totalorder %s20, 1
      %p80 = scmp.ne.s32.totalorder %s75, %s77
      %p81 = scmp.eq.s32.totalorder %s20, 0
      %p82 = por %p80, %p81
      %p83 = scmp.ne.s32.totalorder %s75, %s77
      %p84 = scmp.eq.s32.totalorder %s25, 1
      %p85 = por %p83, %p84
      %p86 = scmp.ne.s32.totalorder %s77, %s78
      %p87 = scmp.eq.s32.totalorder %s25, 0
      %p88 = por %p86, %p87
      %p89 = scmp.ne.s32.totalorder %s77, %s78
      %p90 = scmp.eq.s32.totalorder %s26, 1
      %p91 = por %p89, %p90
      %p93 = scmp.ne.s32.totalorder %s78, %s92
      %p94 = scmp.eq.s32.totalorder %s26, 0
      %p95 = por %p93, %p94
      %s97 = sadd.s32 %s96, 1
      %p100 = scmp.eq.s32.totalorder %s20, 1
      %p101 = scmp.ne.s32.totalorder %s96, %s98
      %p102 = scmp.eq.s32.totalorder %s20, 0
      %p103 = por %p101, %p102
      %p104 = scmp.ne.s32.totalorder %s96, %s98
      %p105 = scmp.eq.s32.totalorder %s25, 1
      %p106 = por %p104, %p105
      %p107 = scmp.ne.s32.totalorder %s98, %s99
      %p108 = scmp.eq.s32.totalorder %s25, 0
      %p109 = por %p107, %p108
      %p110 = scmp.ne.s32.totalorder %s98, %s99
      %p111 = scmp.eq.s32.totalorder %s26, 1
      %p112 = por %p110, %p111
      %p114 = scmp.ne.s32.totalorder %s99, %s113
      %p115 = scmp.eq.s32.totalorder %s26, 0
      %p116 = por %p114, %p115
      %s118 = sadd.s32 %s117, 1
      %p121 = scmp.eq.s32.totalorder %s20, 1
      %p122 = scmp.ne.s32.totalorder %s117, %s119
      %p123 = scmp.eq.s32.totalorder %s20, 0
      %p124 = por %p122, %p123
      %p125 = scmp.ne.s32.totalorder %s117, %s119
      %p126 = scmp.eq.s32.totalorder %s25, 1
      %p127 = por %p125, %p126
      %p128 = scmp.ne.s32.totalorder %s119, %s120
      %p129 = scmp.eq.s32.totalorder %s25, 0
      %p130 = por %p128, %p129
      %p131 = scmp.ne.s32.totalorder %s119, %s120
      %p132 = scmp.eq.s32.totalorder %s26, 1
      %p133 = por %p131, %p132
      %p135 = scmp.ne.s32.totalorder %s120, %s134
      %p136 = scmp.eq.s32.totalorder %s26, 0
      %p137 = por %p135, %p136
      %s139 = sadd.s32 %s138, 1
      %p142 = scmp.eq.s32.totalorder %s20, 1
      %p143 = scmp.ne.s32.totalorder %s138, %s140
      %p144 = scmp.eq.s32.totalorder %s20, 0
      %p145 = por %p143, %p144
      %p146 = scmp.ne.s32.totalorder %s138, %s140
      %p147 = scmp.eq.s32.totalorder %s25, 1
      %p148 = por %p146, %p147
      %p149 = scmp.ne.s32.totalorder %s140, %s141
      %p150 = scmp.eq.s32.totalorder %s25, 0
      %p151 = por %p149, %p150
      %p152 = scmp.ne.s32.totalorder %s140, %s141
      %p153 = scmp.eq.s32.totalorder %s26, 1
      %p154 = por %p152, %p153
      %p156 = scmp.ne.s32.totalorder %s141, %s155
      %p157 = scmp.eq.s32.totalorder %s26, 0
      %p158 = por %p156, %p157
      %s160 = sadd.s32 %s159, 1
      %p163 = scmp.eq.s32.totalorder %s20, 1
      %p164 = scmp.ne.s32.totalorder %s159, %s161
      %p165 = scmp.eq.s32.totalorder %s20, 0
      %p166 = por %p164, %p165
      %p167 = scmp.ne.s32.totalorder %s159, %s161
      %p168 = scmp.eq.s32.totalorder %s25, 1
      %p169 = por %p167, %p168
      %p170 = scmp.ne.s32.totalorder %s161, %s162
      %p171 = scmp.eq.s32.totalorder %s25, 0
      %p172 = por %p170, %p171
      %p173 = scmp.ne.s32.totalorder %s161, %s162
      %p174 = scmp.eq.s32.totalorder %s26, 1
      %p175 = por %p173, %p174
      %p177 = scmp.ne.s32.totalorder %s162, %s176
      %p178 = scmp.eq.s32.totalorder %s26, 0
      %p179 = por %p177, %p178
      %s181 = sadd.s32 %s180, 1
      %p184 = scmp.eq.s32.totalorder %s20, 1
      %p185 = scmp.ne.s32.totalorder %s180, %s182
      %p186 = scmp.eq.s32.totalorder %s20, 0
      %p187 = por %p185, %p186
      %p188 = scmp.ne.s32.totalorder %s180, %s182
      %p189 = scmp.eq.s32.totalorder %s25, 1
      %p190 = por %p188, %p189
      %p191 = scmp.ne.s32.totalorder %s182, %s183
      %p192 = scmp.eq.s32.totalorder %s25, 0
      %p193 = por %p191, %p192
      %p194 = scmp.ne.s32.totalorder %s182, %s183
      %p195 = scmp.eq.s32.totalorder %s26, 1
      %p196 = por %p194, %p195
      %p198 = scmp.ne.s32.totalorder %s183, %s197
      %p199 = scmp.eq.s32.totalorder %s26, 0
      %p200 = por %p198, %p199
      %s202 = sadd.s32 %s201, 1
      %p205 = scmp.eq.s32.totalorder %s20, 1
      %p206 = scmp.ne.s32.totalorder %s201, %s203
      %p207 = scmp.eq.s32.totalorder %s20, 0
      %p208 = por %p206, %p207
      %p209 = scmp.ne.s32.totalorder %s201, %s203
      %p210 = scmp.eq.s32.totalorder %s25, 1
      %p211 = por %p209, %p210
      %p212 = scmp.ne.s32.totalorder %s203, %s204
      %p213 = scmp.eq.s32.totalorder %s25, 0
      %p214 = por %p212, %p213
      %p215 = scmp.ne.s32.totalorder %s203, %s204
      %p216 = scmp.eq.s32.totalorder %s26, 1
      %p217 = por %p215, %p216
      %p219 = scmp.ne.s32.totalorder %s204, %s218
      %p220 = scmp.eq.s32.totalorder %s26, 0
      %p221 = por %p219, %p220
      %s222 = ssub.s32 %s20, %s27
      %p223 = scmp.eq.s32.totalorder %s222, 0
      %s225 = sadd.s32 %s224, 1
      %s226 = scalar_select %p223, %s224, %s225
      %p229 = pneg %p223
      %p230 = scmp.eq.s32.totalorder %s20, 1
      %p231 = por %p229, %p230
      %p232 = scmp.ne.s32.totalorder %s224, %s227
      %p233 = scmp.eq.s32.totalorder %s20, 0
      %p234 = por %p232, %p233
      %p235 = scmp.ne.s32.totalorder %s224, %s227
      %p236 = scmp.eq.s32.totalorder %s25, 1
      %p237 = por %p235, %p236
      %p238 = scmp.ne.s32.totalorder %s227, %s228
      %p239 = scmp.eq.s32.totalorder %s25, 0
      %p240 = por %p238, %p239
      %p241 = scmp.ne.s32.totalorder %s227, %s228
      %p242 = scmp.eq.s32.totalorder %s26, 1
      %p243 = por %p241, %p242
      %p245 = scmp.ne.s32.totalorder %s228, %s244
      %p246 = scmp.eq.s32.totalorder %s26, 0
      %p247 = por %p245, %p246
      %p248 = scmp.le.s32.totalorder 1, %s20
      %p249 = scmp.lt.s32.totalorder %s20, 3
      %p250 = pnand %p248, %p249
      %p251 = pneg %p250
      // Predicated region
      $region9: #{tpu_custom_call.1} parent=5 // pred_check
        _
      $region10: #{tpu_custom_call.1} parent=5 // pred_check_branch
        %253 = sbr.rel (%p250) target = $region12
      $region11: #{tpu_custom_call.1} parent=5 // pred_region
        %s254 = ssub.s32 %s20, 1
        // Predicated region
        $region13: #{tpu_custom_call.1} parent=11 // pred_check
          %p255 = pneg %p67
        $region14: #{tpu_custom_call.1} parent=11 // pred_check_branch
          %257 = sbr.rel (%p255) target = $region16
        $region15: #{tpu_custom_call.1} parent=11 // pred_region
          _
        $region16: #{tpu_custom_call.1} parent=11 // pred_fallthru
          _
        // Predicated region
        $region17: #{tpu_custom_call.1} parent=11 // pred_check
          %p258 = pneg %p88
        $region18: #{tpu_custom_call.1} parent=11 // pred_check_branch
          %260 = sbr.rel (%p258) target = $region20
        $region19: #{tpu_custom_call.1} parent=11 // pred_region
          _
        $region20: #{tpu_custom_call.1} parent=11 // pred_fallthru
          _
        // Predicated region
        $region21: #{tpu_custom_call.1} parent=11 // pred_check
          %p261 = pneg %p109
        $region22: #{tpu_custom_call.1} parent=11 // pred_check_branch
          %263 = sbr.rel (%p261) target = $region24
        $region23: #{tpu_custom_call.1} parent=11 // pred_region
          _
        $region24: #{tpu_custom_call.1} parent=11 // pred_fallthru
          _
        // Predicated region
        $region25: #{tpu_custom_call.1} parent=11 // pred_check
          %p264 = pneg %p130
        $region26: #{tpu_custom_call.1} parent=11 // pred_check_branch
          %266 = sbr.rel (%p264) target = $region28
        $region27: #{tpu_custom_call.1} parent=11 // pred_region
          _
        $region28: #{tpu_custom_call.1} parent=11 // pred_fallthru
          _
        // Predicated region
        $region29: #{tpu_custom_call.1} parent=11 // pred_check
          %p267 = pneg %p151
        $region30: #{tpu_custom_call.1} parent=11 // pred_check_branch
          %269 = sbr.rel (%p267) target = $region32
        $region31: #{tpu_custom_call.1} parent=11 // pred_region
          _
        $region32: #{tpu_custom_call.1} parent=11 // pred_fallthru
          _
        // Predicated region
        $region33: #{tpu_custom_call.1} parent=11 // pred_check
          %p270 = pneg %p172
        $region34: #{tpu_custom_call.1} parent=11 // pred_check_branch
          %272 = sbr.rel (%p270) target = $region36
        $region35: #{tpu_custom_call.1} parent=11 // pred_region
          _
        $region36: #{tpu_custom_call.1} parent=11 // pred_fallthru
          _
        // Predicated region
        $region37: #{tpu_custom_call.1} parent=11 // pred_check
          %p273 = pneg %p193
        $region38: #{tpu_custom_call.1} parent=11 // pred_check_branch
          %275 = sbr.rel (%p273) target = $region40
        $region39: #{tpu_custom_call.1} parent=11 // pred_region
          _
        $region40: #{tpu_custom_call.1} parent=11 // pred_fallthru
          _
        // Predicated region
        $region41: #{tpu_custom_call.1} parent=11 // pred_check
          %p276 = pneg %p214
        $region42: #{tpu_custom_call.1} parent=11 // pred_check_branch
          %278 = sbr.rel (%p276) target = $region44
        $region43: #{tpu_custom_call.1} parent=11 // pred_region
          _
        $region44: #{tpu_custom_call.1} parent=11 // pred_fallthru
          _
      $region12: #{tpu_custom_call.1} parent=5 // pred_fallthru
        _
      %p279 = scmp.lt.s32.totalorder %s20, 2
      // Predicated region
      $region45: #{tpu_custom_call.1} parent=5 // pred_check
        %p280 = pneg %p279
      $region46: #{tpu_custom_call.1} parent=5 // pred_check_branch
        %282 = sbr.rel (%p280) target = $region48
      $region47: #{tpu_custom_call.1} parent=5 // pred_region
        // Predicated region
        $region49: #{tpu_custom_call.1} parent=47 // pred_check
          %p283 = pneg %p40
        $region50: #{tpu_custom_call.1} parent=47 // pred_check_branch
          %285 = sbr.rel (%p283) target = $region52
        $region51: #{tpu_custom_call.1} parent=47 // pred_region
          %s286 = smul.u32 8, %s20
          %p287 = scmp.lt.s32.totalorder %s286, 15
          %s288 = scalar_select %p287, %s286, 15
          %s289 = smul.addr %s288, 2
          %s290 = scalar_lea.vmem %s0, %s289
          %s291 = smul.u32 8, %s20
        $region52: #{tpu_custom_call.1} parent=47 // pred_fallthru
          _
      $region48: #{tpu_custom_call.1} parent=5 // pred_fallthru
        _
      %p292 = scmp.le.s32.totalorder 1, %s20
      %p293 = scmp.lt.s32.totalorder %s20, 3
      %p294 = pnand %p292, %p293
      %p295 = pneg %p294
      // Predicated region
      $region53: #{tpu_custom_call.1} parent=5 // pred_check
        _
      $region54: #{tpu_custom_call.1} parent=5 // pred_check_branch
        %297 = sbr.rel (%p294) target = $region56
      $region55: #{tpu_custom_call.1} parent=5 // pred_region
        %s298 = ssub.s32 %s20, 1
        %s299 = smul.u32 8, %s25
        %p300 = scmp.lt.s32.totalorder %s299, 15
        %s301 = scalar_select %p300, %s299, 15
        %s302 = smul.addr %s301, 2
        %s303 = scalar_lea.vmem %s0, %s302
        %p304 = pneg %p46
        %p305 = pneg %p43
        %p306 = pneg %p67
        %p307 = pneg %p64
        %p308 = pneg %p88
        %p309 = pneg %p85
        %p310 = pneg %p109
        %p311 = pneg %p106
        %p312 = pneg %p130
        %p313 = pneg %p127
        %p314 = pneg %p151
        %p315 = pneg %p148
        %p316 = pneg %p172
        %p317 = pneg %p169
        %p318 = pneg %p193
        %p319 = pneg %p190
        %p320 = pneg %p214
        %p321 = pneg %p211
        %p322 = pneg %p240
        %p323 = pneg %p237
        %s324 = sand.u32 %s227, 1
        %s325 = scalar_lea.sflag [#allocation4], %s324
        %s326 = sand.u32 %s227, 1
        %s327 = smul.addr %s326, 8
        %s328 = scalar_lea.vmem [#allocation3], %s327
        %s329 = smul.u32 8, %s25
        %p330 = scmp.lt.s32.totalorder %s329, 15
        %s331 = scalar_select %p330, %s329, 15
        %s332 = smul.addr %s331, 2
        %s333 = scalar_lea.vmem %s0, %s332
        %s334 = smul.u32 8, %s25
        %s335 = smul.u32 8, %s25
        %v337 = vld [vmem:[%s333] sm:$0xff]
        %v338 = vld [vmem:[%s333 + $0x8] sm:$0xff]
        %v339 = vld [vmem:[%s1] sm:$0xff]
        %v340 = vld [vmem:[%s1 + $0x8] sm:$0xff]
        %v341 = vld [vmem:[%s1 + $0x10] sm:$0xff]
        %v342 = vld [vmem:[%s1 + $0x18] sm:$0xff]
        %v343 = vld [vmem:[%s2] sm:$0xff]
        %v344 = vld [vmem:[%s2 + $0x8] sm:$0xff]
        %v345 = vld [vmem:[%s2 + $0x10] sm:$0xff]
        %v346 = vld [vmem:[%s2 + $0x18] sm:$0xff]
        %348 = vset.pattern.permute.xlu0 0
        %349 = vperm.xlu0 %348, %v339
        %v350 = vpop.permute.xlu0 %349
        %353 = vset.pattern.permute.xlu0 0
        %354 = vperm.xlu0 %353, %v340
        %v355 = vpop.permute.xlu0 %354
        %358 = vset.pattern.permute.xlu0 0
        %359 = vperm.xlu0 %358, %v341
        %v360 = vpop.permute.xlu0 %359
        %363 = vset.pattern.permute.xlu0 0
        %364 = vperm.xlu0 %363, %v342
        %v365 = vpop.permute.xlu0 %364
        %v369 = vperm.slane %v337, 0
        %v370 = vperm.slane %v337, 2
        %v371 = vperm.slane %v337, 4
        %v372 = vperm.slane %v337, 6
        %v373 = vperm.slane %v338, 0
        %v374 = vperm.slane %v338, 2
        %v375 = vperm.slane %v338, 4
        %v376 = vperm.slane %v338, 6
        %v385 = vperm.slane %v369, 0
        %v386 = vperm.slane %v370, 0
        %v387 = vperm.slane %v371, 0
        %v388 = vperm.slane %v372, 0
        %v389 = vperm.slane %v373, 0
        %v390 = vperm.slane %v374, 0
        %v391 = vperm.slane %v375, 0
        %v392 = vperm.slane %v376, 0
        %v393 = vmul.f32 %v350, %v385
        %v394 = vmul.f32 %v350, %v386
        %v395 = vmul.f32 %v350, %v387
        %v396 = vmul.f32 %v350, %v388
        %v397 = vmul.f32 %v350, %v389
        %v398 = vmul.f32 %v350, %v390
        %v399 = vmul.f32 %v350, %v391
        %v400 = vmul.f32 %v350, %v392
        %v401 = vmul.f32 %v355, %v385
        %v402 = vmul.f32 %v355, %v386
        %v403 = vmul.f32 %v355, %v387
        %v404 = vmul.f32 %v355, %v388
        %v405 = vmul.f32 %v355, %v389
        %v406 = vmul.f32 %v355, %v390
        %v407 = vmul.f32 %v355, %v391
        %v408 = vmul.f32 %v355, %v392
        %v409 = vmul.f32 %v360, %v385
        %v410 = vmul.f32 %v360, %v386
        %v411 = vmul.f32 %v360, %v387
        %v412 = vmul.f32 %v360, %v388
        %v413 = vmul.f32 %v360, %v389
        %v414 = vmul.f32 %v360, %v390
        %v415 = vmul.f32 %v360, %v391
        %v416 = vmul.f32 %v360, %v392
        %v417 = vmul.f32 %v365, %v385
        %v418 = vmul.f32 %v365, %v386
        %v419 = vmul.f32 %v365, %v387
        %v420 = vmul.f32 %v365, %v388
        %v421 = vmul.f32 %v365, %v389
        %v422 = vmul.f32 %v365, %v390
        %v423 = vmul.f32 %v365, %v391
        %v424 = vmul.f32 %v365, %v392
        %426 = vset.pattern.permute.xlu0 0
        %427 = vperm.xlu0 %426, %v343
        %v428 = vpop.permute.xlu0 %427
        %431 = vset.pattern.permute.xlu0 0
        %432 = vperm.xlu0 %431, %v344
        %v433 = vpop.permute.xlu0 %432
        %436 = vset.pattern.permute.xlu0 0
        %437 = vperm.xlu0 %436, %v345
        %v438 = vpop.permute.xlu0 %437
        %441 = vset.pattern.permute.xlu0 0
        %442 = vperm.xlu0 %441, %v346
        %v443 = vpop.permute.xlu0 %442
        %v445 = vadd.f32 %v428, %v393
        %v446 = vadd.f32 %v428, %v394
        %v447 = vadd.f32 %v428, %v395
        %v448 = vadd.f32 %v428, %v396
        %v449 = vadd.f32 %v428, %v397
        %v450 = vadd.f32 %v428, %v398
        %v451 = vadd.f32 %v428, %v399
        %v452 = vadd.f32 %v428, %v400
        %v453 = vadd.f32 %v433, %v401
        %v454 = vadd.f32 %v433, %v402
        %v455 = vadd.f32 %v433, %v403
        %v456 = vadd.f32 %v433, %v404
        %v457 = vadd.f32 %v433, %v405
        %v458 = vadd.f32 %v433, %v406
        %v459 = vadd.f32 %v433, %v407
        %v460 = vadd.f32 %v433, %v408
        %v461 = vadd.f32 %v438, %v409
        %v462 = vadd.f32 %v438, %v410
        %v463 = vadd.f32 %v438, %v411
        %v464 = vadd.f32 %v438, %v412
        %v465 = vadd.f32 %v438, %v413
        %v466 = vadd.f32 %v438, %v414
        %v467 = vadd.f32 %v438, %v415
        %v468 = vadd.f32 %v438, %v416
        %v469 = vadd.f32 %v443, %v417
        %v470 = vadd.f32 %v443, %v418
        %v471 = vadd.f32 %v443, %v419
        %v472 = vadd.f32 %v443, %v420
        %v473 = vadd.f32 %v443, %v421
        %v474 = vadd.f32 %v443, %v422
        %v475 = vadd.f32 %v443, %v423
        %v476 = vadd.f32 %v443, %v424
        %477 = vset.pattern.permute.xlu0 1
        %478 = vperm.xlu0 %477, %v339
        %v479 = vpop.permute.xlu0 %478
        %481 = vset.pattern.permute.xlu0 1
        %482 = vperm.xlu0 %481, %v340
        %v483 = vpop.permute.xlu0 %482
        %485 = vset.pattern.permute.xlu0 1
        %486 = vperm.xlu0 %485, %v341
        %v487 = vpop.permute.xlu0 %486
        %489 = vset.pattern.permute.xlu0 1
        %490 = vperm.xlu0 %489, %v342
        %v491 = vpop.permute.xlu0 %490
        %v493 = vperm.slane %v337, 1
        %v494 = vperm.slane %v337, 3
        %v495 = vperm.slane %v337, 5
        %v496 = vperm.slane %v337, 7
        %v497 = vperm.slane %v338, 1
        %v498 = vperm.slane %v338, 3
        %v499 = vperm.slane %v338, 5
        %v500 = vperm.slane %v338, 7
        %v509 = vperm.slane %v493, 1
        %v510 = vperm.slane %v494, 1
        %v511 = vperm.slane %v495, 1
        %v512 = vperm.slane %v496, 1
        %v513 = vperm.slane %v497, 1
        %v514 = vperm.slane %v498, 1
        %v515 = vperm.slane %v499, 1
        %v516 = vperm.slane %v500, 1
        %v517 = vmul.f32 %v479, %v509
        %v518 = vmul.f32 %v479, %v510
        %v519 = vmul.f32 %v479, %v511
        %v520 = vmul.f32 %v479, %v512
        %v521 = vmul.f32 %v479, %v513
        %v522 = vmul.f32 %v479, %v514
        %v523 = vmul.f32 %v479, %v515
        %v524 = vmul.f32 %v479, %v516
        %v525 = vmul.f32 %v483, %v509
        %v526 = vmul.f32 %v483, %v510
        %v527 = vmul.f32 %v483, %v511
        %v528 = vmul.f32 %v483, %v512
        %v529 = vmul.f32 %v483, %v513
        %v530 = vmul.f32 %v483, %v514
        %v531 = vmul.f32 %v483, %v515
        %v532 = vmul.f32 %v483, %v516
        %v533 = vmul.f32 %v487, %v509
        %v534 = vmul.f32 %v487, %v510
        %v535 = vmul.f32 %v487, %v511
        %v536 = vmul.f32 %v487, %v512
        %v537 = vmul.f32 %v487, %v513
        %v538 = vmul.f32 %v487, %v514
        %v539 = vmul.f32 %v487, %v515
        %v540 = vmul.f32 %v487, %v516
        %v541 = vmul.f32 %v491, %v509
        %v542 = vmul.f32 %v491, %v510
        %v543 = vmul.f32 %v491, %v511
        %v544 = vmul.f32 %v491, %v512
        %v545 = vmul.f32 %v491, %v513
        %v546 = vmul.f32 %v491, %v514
        %v547 = vmul.f32 %v491, %v515
        %v548 = vmul.f32 %v491, %v516
        %v549 = vadd.f32 %v445, %v517
        %v550 = vadd.f32 %v446, %v518
        %v551 = vadd.f32 %v447, %v519
        %v552 = vadd.f32 %v448, %v520
        %v553 = vadd.f32 %v449, %v521
        %v554 = vadd.f32 %v450, %v522
        %v555 = vadd.f32 %v451, %v523
        %v556 = vadd.f32 %v452, %v524
        %v557 = vadd.f32 %v453, %v525
        %v558 = vadd.f32 %v454, %v526
        %v559 = vadd.f32 %v455, %v527
        %v560 = vadd.f32 %v456, %v528
        %v561 = vadd.f32 %v457, %v529
        %v562 = vadd.f32 %v458, %v530
        %v563 = vadd.f32 %v459, %v531
        %v564 = vadd.f32 %v460, %v532
        %v565 = vadd.f32 %v461, %v533
        %v566 = vadd.f32 %v462, %v534
        %v567 = vadd.f32 %v463, %v535
        %v568 = vadd.f32 %v464, %v536
        %v569 = vadd.f32 %v465, %v537
        %v570 = vadd.f32 %v466, %v538
        %v571 = vadd.f32 %v467, %v539
        %v572 = vadd.f32 %v468, %v540
        %v573 = vadd.f32 %v469, %v541
        %v574 = vadd.f32 %v470, %v542
        %v575 = vadd.f32 %v471, %v543
        %v576 = vadd.f32 %v472, %v544
        %v577 = vadd.f32 %v473, %v545
        %v578 = vadd.f32 %v474, %v546
        %v579 = vadd.f32 %v475, %v547
        %v580 = vadd.f32 %v476, %v548
        %v581 = vtanh.pop %v549
        %v582 = vtanh.pop %v550
        %v583 = vtanh.pop %v551
        %v584 = vtanh.pop %v552
        %v585 = vtanh.pop %v553
        %v586 = vtanh.pop %v554
        %v587 = vtanh.pop %v555
        %v588 = vtanh.pop %v556
        %v589 = vtanh.pop %v557
        %v590 = vtanh.pop %v558
        %v591 = vtanh.pop %v559
        %v592 = vtanh.pop %v560
        %v593 = vtanh.pop %v561
        %v594 = vtanh.pop %v562
        %v595 = vtanh.pop %v563
        %v596 = vtanh.pop %v564
        %v597 = vtanh.pop %v565
        %v598 = vtanh.pop %v566
        %v599 = vtanh.pop %v567
        %v600 = vtanh.pop %v568
        %v601 = vtanh.pop %v569
        %v602 = vtanh.pop %v570
        %v603 = vtanh.pop %v571
        %v604 = vtanh.pop %v572
        %v605 = vtanh.pop %v573
        %v606 = vtanh.pop %v574
        %v607 = vtanh.pop %v575
        %v608 = vtanh.pop %v576
        %v609 = vtanh.pop %v577
        %v610 = vtanh.pop %v578
        %v611 = vtanh.pop %v579
        %v612 = vtanh.pop %v580
        %v613 = vld [vmem:[%s3] sm:$0xf]
        %v614 = vld [vmem:[%s3 + $0x4] sm:$0xf]
        %v615 = vld [vmem:[%s3 + $0x8] sm:$0xf]
        %v616 = vld [vmem:[%s3 + $0xc] sm:$0xf]
        %v617 = vld [vmem:[%s4] sm:$0xff]
        %v618 = vld [vmem:[%s4 + $0x8] sm:$0xff]
        %v619 = vld [vmem:[%s4 + $0x10] sm:$0xff]
        %v620 = vld [vmem:[%s4 + $0x18] sm:$0xff]
        %v621 = vpack.c.bf16 %v589, %v581
        %v622 = vpack.c.bf16 %v590, %v582
        %v623 = vpack.c.bf16 %v591, %v583
        %v624 = vpack.c.bf16 %v592, %v584
        %v625 = vpack.c.bf16 %v593, %v585
        %v626 = vpack.c.bf16 %v594, %v586
        %v627 = vpack.c.bf16 %v595, %v587
        %v628 = vpack.c.bf16 %v596, %v588
        %v629 = vpack.c.bf16 %v605, %v597
        %v630 = vpack.c.bf16 %v606, %v598
        %v631 = vpack.c.bf16 %v607, %v599
        %v632 = vpack.c.bf16 %v608, %v600
        %v633 = vpack.c.bf16 %v609, %v601
        %v634 = vpack.c.bf16 %v610, %v602
        %v635 = vpack.c.bf16 %v611, %v603
        %v636 = vpack.c.bf16 %v612, %v604
        %638 = vset.pattern.permute.xlu0 0
        %639 = vperm.xlu0 %638, %v617
        %v640 = vpop.permute.xlu0 %639
        %643 = vset.pattern.permute.xlu0 0
        %644 = vperm.xlu0 %643, %v618
        %v645 = vpop.permute.xlu0 %644
        %648 = vset.pattern.permute.xlu0 0
        %649 = vperm.xlu0 %648, %v619
        %v650 = vpop.permute.xlu0 %649
        %653 = vset.pattern.permute.xlu0 0
        %654 = vperm.xlu0 %653, %v620
        %v655 = vpop.permute.xlu0 %654
        %v661 = vunpack.c.l.b16 %v613
        %v662 = vunpack.c.l.b16 %v614
        %v663 = vunpack.c.l.b16 %v615
        %v664 = vunpack.c.l.b16 %v616
        %v665 = vpack.c.b16 %v662, %v661
        %v666 = vpack.c.b16 %v664, %v663
        %vm667 = vcmask 261120
        %v669 = vsel %vm667, %v665, 0
        %v672 = vsel %vm667, %v666, 0
        %674 = vmatpush.bf16.msra.mxu0 0
        %675 = vmatpush.bf16.msra.mxu0 0
        %676 = vmatpush.bf16.msra.mxu0 0
        %677 = vmatpush.bf16.msra.mxu0 0
        %678 = vmatpush.bf16.msra.mxu0 0
        %679 = vmatpush.bf16.msra.mxu0 0
        %680 = vmatpush.bf16.msra.mxu0 %v629
        %681 = vmatpush.bf16.msra.mxu0 %v621
        %682 = vmatmul.bf16.gmra.mxu0 %v669
        %v683 = vpop.f32.mrf.mxu0
        %v684 = vadd.f32 %v640, %v683
        %v685 = vpop.f32.mrf.mxu0
        %v686 = vadd.f32 %v645, %v685
        %687 = vmatmul.bf16.gmra.mxu0 %v672
        %v688 = vpop.f32.mrf.mxu0
        %v689 = vadd.f32 %v650, %v688
        %v690 = vpop.f32.mrf.mxu0
        %v691 = vadd.f32 %v655, %v690
        %692 = vdwg.mxu0
        %693 = vmatpush.bf16.msra.mxu0 0
        %694 = vmatpush.bf16.msra.mxu0 0
        %695 = vmatpush.bf16.msra.mxu0 0
        %696 = vmatpush.bf16.msra.mxu0 0
        %697 = vmatpush.bf16.msra.mxu0 0
        %698 = vmatpush.bf16.msra.mxu0 0
        %699 = vmatpush.bf16.msra.mxu0 %v630
        %700 = vmatpush.bf16.msra.mxu0 %v622
        %701 = vmatmul.bf16.gmra.mxu0 %v669
        %v702 = vpop.f32.mrf.mxu0
        %v703 = vadd.f32 %v640, %v702
        %v704 = vpop.f32.mrf.mxu0
        %v705 = vadd.f32 %v645, %v704
        %706 = vmatmul.bf16.gmra.mxu0 %v672
        %v707 = vpop.f32.mrf.mxu0
        %v708 = vadd.f32 %v650, %v707
        %v709 = vpop.f32.mrf.mxu0
        %v710 = vadd.f32 %v655, %v709
        %711 = vdwg.mxu0
        %712 = vmatpush.bf16.msra.mxu0 0
        %713 = vmatpush.bf16.msra.mxu0 0
        %714 = vmatpush.bf16.msra.mxu0 0
        %715 = vmatpush.bf16.msra.mxu0 0
        %716 = vmatpush.bf16.msra.mxu0 0
        %717 = vmatpush.bf16.msra.mxu0 0
        %718 = vmatpush.bf16.msra.mxu0 %v631
        %719 = vmatpush.bf16.msra.mxu0 %v623
        %720 = vmatmul.bf16.gmra.mxu0 %v669
        %v721 = vpop.f32.mrf.mxu0
        %v722 = vadd.f32 %v640, %v721
        %v723 = vpop.f32.mrf.mxu0
        %v724 = vadd.f32 %v645, %v723
        %725 = vmatmul.bf16.gmra.mxu0 %v672
        %v726 = vpop.f32.mrf.mxu0
        %v727 = vadd.f32 %v650, %v726
        %v728 = vpop.f32.mrf.mxu0
        %v729 = vadd.f32 %v655, %v728
        %730 = vdwg.mxu0
        %731 = vmatpush.bf16.msra.mxu0 0
        %732 = vmatpush.bf16.msra.mxu0 0
        %733 = vmatpush.bf16.msra.mxu0 0
        %734 = vmatpush.bf16.msra.mxu0 0
        %735 = vmatpush.bf16.msra.mxu0 0
        %736 = vmatpush.bf16.msra.mxu0 0
        %737 = vmatpush.bf16.msra.mxu0 %v632
        %738 = vmatpush.bf16.msra.mxu0 %v624
        %739 = vmatmul.bf16.gmra.mxu0 %v669
        %v740 = vpop.f32.mrf.mxu0
        %v741 = vadd.f32 %v640, %v740
        %v742 = vpop.f32.mrf.mxu0
        %v743 = vadd.f32 %v645, %v742
        %744 = vmatmul.bf16.gmra.mxu0 %v672
        %v745 = vpop.f32.mrf.mxu0
        %v746 = vadd.f32 %v650, %v745
        %v747 = vpop.f32.mrf.mxu0
        %v748 = vadd.f32 %v655, %v747
        %749 = vdwg.mxu0
        %750 = vmatpush.bf16.msra.mxu0 0
        %751 = vmatpush.bf16.msra.mxu0 0
        %752 = vmatpush.bf16.msra.mxu0 0
        %753 = vmatpush.bf16.msra.mxu0 0
        %754 = vmatpush.bf16.msra.mxu0 0
        %755 = vmatpush.bf16.msra.mxu0 0
        %756 = vmatpush.bf16.msra.mxu0 %v633
        %757 = vmatpush.bf16.msra.mxu0 %v625
        %758 = vmatmul.bf16.gmra.mxu0 %v669
        %v759 = vpop.f32.mrf.mxu0
        %v760 = vadd.f32 %v640, %v759
        %v761 = vpop.f32.mrf.mxu0
        %v762 = vadd.f32 %v645, %v761
        %763 = vmatmul.bf16.gmra.mxu0 %v672
        %v764 = vpop.f32.mrf.mxu0
        %v765 = vadd.f32 %v650, %v764
        %v766 = vpop.f32.mrf.mxu0
        %v767 = vadd.f32 %v655, %v766
        %768 = vdwg.mxu0
        %769 = vmatpush.bf16.msra.mxu0 0
        %770 = vmatpush.bf16.msra.mxu0 0
        %771 = vmatpush.bf16.msra.mxu0 0
        %772 = vmatpush.bf16.msra.mxu0 0
        %773 = vmatpush.bf16.msra.mxu0 0
        %774 = vmatpush.bf16.msra.mxu0 0
        %775 = vmatpush.bf16.msra.mxu0 %v634
        %776 = vmatpush.bf16.msra.mxu0 %v626
        %777 = vmatmul.bf16.gmra.mxu0 %v669
        %v778 = vpop.f32.mrf.mxu0
        %v779 = vadd.f32 %v640, %v778
        %v780 = vpop.f32.mrf.mxu0
        %v781 = vadd.f32 %v645, %v780
        %782 = vmatmul.bf16.gmra.mxu0 %v672
        %v783 = vpop.f32.mrf.mxu0
        %v784 = vadd.f32 %v650, %v783
        %v785 = vpop.f32.mrf.mxu0
        %v786 = vadd.f32 %v655, %v785
        %787 = vdwg.mxu0
        %788 = vmatpush.bf16.msra.mxu0 0
        %789 = vmatpush.bf16.msra.mxu0 0
        %790 = vmatpush.bf16.msra.mxu0 0
        %791 = vmatpush.bf16.msra.mxu0 0
        %792 = vmatpush.bf16.msra.mxu0 0
        %793 = vmatpush.bf16.msra.mxu0 0
        %794 = vmatpush.bf16.msra.mxu0 %v635
        %795 = vmatpush.bf16.msra.mxu0 %v627
        %796 = vmatmul.bf16.gmra.mxu0 %v669
        %v797 = vpop.f32.mrf.mxu0
        %v798 = vadd.f32 %v640, %v797
        %v799 = vpop.f32.mrf.mxu0
        %v800 = vadd.f32 %v645, %v799
        %801 = vmatmul.bf16.gmra.mxu0 %v672
        %v802 = vpop.f32.mrf.mxu0
        %v803 = vadd.f32 %v650, %v802
        %v804 = vpop.f32.mrf.mxu0
        %v805 = vadd.f32 %v655, %v804
        %806 = vdwg.mxu0
        %807 = vmatpush.bf16.msra.mxu0 0
        %808 = vmatpush.bf16.msra.mxu0 0
        %809 = vmatpush.bf16.msra.mxu0 0
        %810 = vmatpush.bf16.msra.mxu0 0
        %811 = vmatpush.bf16.msra.mxu0 0
        %812 = vmatpush.bf16.msra.mxu0 0
        %813 = vmatpush.bf16.msra.mxu0 %v636
        %814 = vmatpush.bf16.msra.mxu0 %v628
        %815 = vmatmul.bf16.gmra.mxu0 %v669
        %v816 = vpop.f32.mrf.mxu0
        %v817 = vadd.f32 %v640, %v816
        %v818 = vpop.f32.mrf.mxu0
        %v819 = vadd.f32 %v645, %v818
        %820 = vmatmul.bf16.gmra.mxu0 %v672
        %v821 = vpop.f32.mrf.mxu0
        %v822 = vadd.f32 %v650, %v821
        %v823 = vpop.f32.mrf.mxu0
        %v824 = vadd.f32 %v655, %v823
        %825 = vdwg.mxu0
        %v826 = vtanh.pop %v684
        %v827 = vtanh.pop %v703
        %v828 = vtanh.pop %v722
        %v829 = vtanh.pop %v741
        %v830 = vtanh.pop %v760
        %v831 = vtanh.pop %v779
        %v832 = vtanh.pop %v798
        %v833 = vtanh.pop %v817
        %v834 = vtanh.pop %v686
        %v835 = vtanh.pop %v705
        %v836 = vtanh.pop %v724
        %v837 = vtanh.pop %v743
        %v838 = vtanh.pop %v762
        %v839 = vtanh.pop %v781
        %v840 = vtanh.pop %v800
        %v841 = vtanh.pop %v819
        %v842 = vtanh.pop %v689
        %v843 = vtanh.pop %v708
        %v844 = vtanh.pop %v727
        %v845 = vtanh.pop %v746
        %v846 = vtanh.pop %v765
        %v847 = vtanh.pop %v784
        %v848 = vtanh.pop %v803
        %v849 = vtanh.pop %v822
        %v850 = vtanh.pop %v691
        %v851 = vtanh.pop %v710
        %v852 = vtanh.pop %v729
        %v853 = vtanh.pop %v748
        %v854 = vtanh.pop %v767
        %v855 = vtanh.pop %v786
        %v856 = vtanh.pop %v805
        %v857 = vtanh.pop %v824
        %v858 = vld [vmem:[%s5] sm:$0xf]
        %v859 = vld [vmem:[%s5 + $0x4] sm:$0xf]
        %v860 = vld [vmem:[%s5 + $0x8] sm:$0xf]
        %v861 = vld [vmem:[%s5 + $0xc] sm:$0xf]
        %v862 = vld [vmem:[%s6] sm:$0xff]
        %v863 = vld [vmem:[%s6 + $0x8] sm:$0xff]
        %v864 = vld [vmem:[%s6 + $0x10] sm:$0xff]
        %v865 = vld [vmem:[%s6 + $0x18] sm:$0xff]
        %v866 = vpack.c.bf16 %v834, %v826
        %v867 = vpack.c.bf16 %v835, %v827
        %v868 = vpack.c.bf16 %v836, %v828
        %v869 = vpack.c.bf16 %v837, %v829
        %v870 = vpack.c.bf16 %v838, %v830
        %v871 = vpack.c.bf16 %v839, %v831
        %v872 = vpack.c.bf16 %v840, %v832
        %v873 = vpack.c.bf16 %v841, %v833
        %v874 = vpack.c.bf16 %v850, %v842
        %v875 = vpack.c.bf16 %v851, %v843
        %v876 = vpack.c.bf16 %v852, %v844
        %v877 = vpack.c.bf16 %v853, %v845
        %v878 = vpack.c.bf16 %v854, %v846
        %v879 = vpack.c.bf16 %v855, %v847
        %v880 = vpack.c.bf16 %v856, %v848
        %v881 = vpack.c.bf16 %v857, %v849
        %883 = vset.pattern.permute.xlu0 0
        %884 = vperm.xlu0 %883, %v862
        %v885 = vpop.permute.xlu0 %884
        %888 = vset.pattern.permute.xlu0 0
        %889 = vperm.xlu0 %888, %v863
        %v890 = vpop.permute.xlu0 %889
        %893 = vset.pattern.permute.xlu0 0
        %894 = vperm.xlu0 %893, %v864
        %v895 = vpop.permute.xlu0 %894
        %898 = vset.pattern.permute.xlu0 0
        %899 = vperm.xlu0 %898, %v865
        %v900 = vpop.permute.xlu0 %899
        %v906 = vunpack.c.l.b16 %v858
        %v907 = vunpack.c.l.b16 %v859
        %v908 = vunpack.c.l.b16 %v860
        %v909 = vunpack.c.l.b16 %v861
        %v910 = vpack.c.b16 %v907, %v906
        %v911 = vpack.c.b16 %v909, %v908
        %v913 = vsel %vm667, %v910, 0
        %v916 = vsel %vm667, %v911, 0
        %918 = vmatpush.bf16.msra.mxu0 0
        %919 = vmatpush.bf16.msra.mxu0 0
        %920 = vmatpush.bf16.msra.mxu0 0
        %921 = vmatpush.bf16.msra.mxu0 0
        %922 = vmatpush.bf16.msra.mxu0 0
        %923 = vmatpush.bf16.msra.mxu0 0
        %924 = vmatpush.bf16.msra.mxu0 %v874
        %925 = vmatpush.bf16.msra.mxu0 %v866
        %926 = vmatmul.bf16.gmra.mxu0 %v913
        %v927 = vpop.f32.mrf.mxu0
        %v928 = vadd.f32 %v885, %v927
        %v929 = vpop.f32.mrf.mxu0
        %v930 = vadd.f32 %v890, %v929
        %931 = vmatmul.bf16.gmra.mxu0 %v916
        %v932 = vpop.f32.mrf.mxu0
        %v933 = vadd.f32 %v895, %v932
        %v934 = vpop.f32.mrf.mxu0
        %v935 = vadd.f32 %v900, %v934
        %936 = vdwg.mxu0
        %937 = vmatpush.bf16.msra.mxu0 0
        %938 = vmatpush.bf16.msra.mxu0 0
        %939 = vmatpush.bf16.msra.mxu0 0
        %940 = vmatpush.bf16.msra.mxu0 0
        %941 = vmatpush.bf16.msra.mxu0 0
        %942 = vmatpush.bf16.msra.mxu0 0
        %943 = vmatpush.bf16.msra.mxu0 %v875
        %944 = vmatpush.bf16.msra.mxu0 %v867
        %945 = vmatmul.bf16.gmra.mxu0 %v913
        %v946 = vpop.f32.mrf.mxu0
        %v947 = vadd.f32 %v885, %v946
        %v948 = vpop.f32.mrf.mxu0
        %v949 = vadd.f32 %v890, %v948
        %950 = vmatmul.bf16.gmra.mxu0 %v916
        %v951 = vpop.f32.mrf.mxu0
        %v952 = vadd.f32 %v895, %v951
        %v953 = vpop.f32.mrf.mxu0
        %v954 = vadd.f32 %v900, %v953
        %955 = vdwg.mxu0
        %956 = vmatpush.bf16.msra.mxu0 0
        %957 = vmatpush.bf16.msra.mxu0 0
        %958 = vmatpush.bf16.msra.mxu0 0
        %959 = vmatpush.bf16.msra.mxu0 0
        %960 = vmatpush.bf16.msra.mxu0 0
        %961 = vmatpush.bf16.msra.mxu0 0
        %962 = vmatpush.bf16.msra.mxu0 %v876
        %963 = vmatpush.bf16.msra.mxu0 %v868
        %964 = vmatmul.bf16.gmra.mxu0 %v913
        %v965 = vpop.f32.mrf.mxu0
        %v966 = vadd.f32 %v885, %v965
        %v967 = vpop.f32.mrf.mxu0
        %v968 = vadd.f32 %v890, %v967
        %969 = vmatmul.bf16.gmra.mxu0 %v916
        %v970 = vpop.f32.mrf.mxu0
        %v971 = vadd.f32 %v895, %v970
        %v972 = vpop.f32.mrf.mxu0
        %v973 = vadd.f32 %v900, %v972
        %974 = vdwg.mxu0
        %975 = vmatpush.bf16.msra.mxu0 0
        %976 = vmatpush.bf16.msra.mxu0 0
        %977 = vmatpush.bf16.msra.mxu0 0
        %978 = vmatpush.bf16.msra.mxu0 0
        %979 = vmatpush.bf16.msra.mxu0 0
        %980 = vmatpush.bf16.msra.mxu0 0
        %981 = vmatpush.bf16.msra.mxu0 %v877
        %982 = vmatpush.bf16.msra.mxu0 %v869
        %983 = vmatmul.bf16.gmra.mxu0 %v913
        %v984 = vpop.f32.mrf.mxu0
        %v985 = vadd.f32 %v885, %v984
        %v986 = vpop.f32.mrf.mxu0
        %v987 = vadd.f32 %v890, %v986
        %988 = vmatmul.bf16.gmra.mxu0 %v916
        %v989 = vpop.f32.mrf.mxu0
        %v990 = vadd.f32 %v895, %v989
        %v991 = vpop.f32.mrf.mxu0
        %v992 = vadd.f32 %v900, %v991
        %993 = vdwg.mxu0
        %994 = vmatpush.bf16.msra.mxu0 0
        %995 = vmatpush.bf16.msra.mxu0 0
        %996 = vmatpush.bf16.msra.mxu0 0
        %997 = vmatpush.bf16.msra.mxu0 0
        %998 = vmatpush.bf16.msra.mxu0 0
        %999 = vmatpush.bf16.msra.mxu0 0
        %1000 = vmatpush.bf16.msra.mxu0 %v878
        %1001 = vmatpush.bf16.msra.mxu0 %v870
        %1002 = vmatmul.bf16.gmra.mxu0 %v913
        %v1003 = vpop.f32.mrf.mxu0
        %v1004 = vadd.f32 %v885, %v1003
        %v1005 = vpop.f32.mrf.mxu0
        %v1006 = vadd.f32 %v890, %v1005
        %1007 = vmatmul.bf16.gmra.mxu0 %v916
        %v1008 = vpop.f32.mrf.mxu0
        %v1009 = vadd.f32 %v895, %v1008
        %v1010 = vpop.f32.mrf.mxu0
        %v1011 = vadd.f32 %v900, %v1010
        %1012 = vdwg.mxu0
        %1013 = vmatpush.bf16.msra.mxu0 0
        %1014 = vmatpush.bf16.msra.mxu0 0
        %1015 = vmatpush.bf16.msra.mxu0 0
        %1016 = vmatpush.bf16.msra.mxu0 0
        %1017 = vmatpush.bf16.msra.mxu0 0
        %1018 = vmatpush.bf16.msra.mxu0 0
        %1019 = vmatpush.bf16.msra.mxu0 %v879
        %1020 = vmatpush.bf16.msra.mxu0 %v871
        %1021 = vmatmul.bf16.gmra.mxu0 %v913
        %v1022 = vpop.f32.mrf.mxu0
        %v1023 = vadd.f32 %v885, %v1022
        %v1024 = vpop.f32.mrf.mxu0
        %v1025 = vadd.f32 %v890, %v1024
        %1026 = vmatmul.bf16.gmra.mxu0 %v916
        %v1027 = vpop.f32.mrf.mxu0
        %v1028 = vadd.f32 %v895, %v1027
        %v1029 = vpop.f32.mrf.mxu0
        %v1030 = vadd.f32 %v900, %v1029
        %1031 = vdwg.mxu0
        %1032 = vmatpush.bf16.msra.mxu0 0
        %1033 = vmatpush.bf16.msra.mxu0 0
        %1034 = vmatpush.bf16.msra.mxu0 0
        %1035 = vmatpush.bf16.msra.mxu0 0
        %1036 = vmatpush.bf16.msra.mxu0 0
        %1037 = vmatpush.bf16.msra.mxu0 0
        %1038 = vmatpush.bf16.msra.mxu0 %v880
        %1039 = vmatpush.bf16.msra.mxu0 %v872
        %1040 = vmatmul.bf16.gmra.mxu0 %v913
        %v1041 = vpop.f32.mrf.mxu0
        %v1042 = vadd.f32 %v885, %v1041
        %v1043 = vpop.f32.mrf.mxu0
        %v1044 = vadd.f32 %v890, %v1043
        %1045 = vmatmul.bf16.gmra.mxu0 %v916
        %v1046 = vpop.f32.mrf.mxu0
        %v1047 = vadd.f32 %v895, %v1046
        %v1048 = vpop.f32.mrf.mxu0
        %v1049 = vadd.f32 %v900, %v1048
        %1050 = vdwg.mxu0
        %1051 = vmatpush.bf16.msra.mxu0 0
        %1052 = vmatpush.bf16.msra.mxu0 0
        %1053 = vmatpush.bf16.msra.mxu0 0
        %1054 = vmatpush.bf16.msra.mxu0 0
        %1055 = vmatpush.bf16.msra.mxu0 0
        %1056 = vmatpush.bf16.msra.mxu0 0
        %1057 = vmatpush.bf16.msra.mxu0 %v881
        %1058 = vmatpush.bf16.msra.mxu0 %v873
        %1059 = vmatmul.bf16.gmra.mxu0 %v913
        %v1060 = vpop.f32.mrf.mxu0
        %v1061 = vadd.f32 %v885, %v1060
        %v1062 = vpop.f32.mrf.mxu0
        %v1063 = vadd.f32 %v890, %v1062
        %1064 = vmatmul.bf16.gmra.mxu0 %v916
        %v1065 = vpop.f32.mrf.mxu0
        %v1066 = vadd.f32 %v895, %v1065
        %v1067 = vpop.f32.mrf.mxu0
        %v1068 = vadd.f32 %v900, %v1067
        %1069 = vdwg.mxu0
        %v1070 = vtanh.pop %v928
        %v1071 = vtanh.pop %v947
        %v1072 = vtanh.pop %v966
        %v1073 = vtanh.pop %v985
        %v1074 = vtanh.pop %v1004
        %v1075 = vtanh.pop %v1023
        %v1076 = vtanh.pop %v1042
        %v1077 = vtanh.pop %v1061
        %v1078 = vtanh.pop %v930
        %v1079 = vtanh.pop %v949
        %v1080 = vtanh.pop %v968
        %v1081 = vtanh.pop %v987
        %v1082 = vtanh.pop %v1006
        %v1083 = vtanh.pop %v1025
        %v1084 = vtanh.pop %v1044
        %v1085 = vtanh.pop %v1063
        %v1086 = vtanh.pop %v933
        %v1087 = vtanh.pop %v952
        %v1088 = vtanh.pop %v971
        %v1089 = vtanh.pop %v990
        %v1090 = vtanh.pop %v1009
        %v1091 = vtanh.pop %v1028
        %v1092 = vtanh.pop %v1047
        %v1093 = vtanh.pop %v1066
        %v1094 = vtanh.pop %v935
        %v1095 = vtanh.pop %v954
        %v1096 = vtanh.pop %v973
        %v1097 = vtanh.pop %v992
        %v1098 = vtanh.pop %v1011
        %v1099 = vtanh.pop %v1030
        %v1100 = vtanh.pop %v1049
        %v1101 = vtanh.pop %v1068
        %v1102 = vld [vmem:[%s7] sm:$0x1]
        %v1103 = vld [vmem:[#allocation2] sm:$0x1]
        %v1104 = vpack.c.bf16 %v1078, %v1070
        %v1105 = vpack.c.bf16 %v1079, %v1071
        %v1106 = vpack.c.bf16 %v1080, %v1072
        %v1107 = vpack.c.bf16 %v1081, %v1073
        %v1108 = vpack.c.bf16 %v1082, %v1074
        %v1109 = vpack.c.bf16 %v1083, %v1075
        %v1110 = vpack.c.bf16 %v1084, %v1076
        %v1111 = vpack.c.bf16 %v1085, %v1077
        %v1112 = vpack.c.bf16 %v1094, %v1086
        %v1113 = vpack.c.bf16 %v1095, %v1087
        %v1114 = vpack.c.bf16 %v1096, %v1088
        %v1115 = vpack.c.bf16 %v1097, %v1089
        %v1116 = vpack.c.bf16 %v1098, %v1090
        %v1117 = vpack.c.bf16 %v1099, %v1091
        %v1118 = vpack.c.bf16 %v1100, %v1092
        %v1119 = vpack.c.bf16 %v1101, %v1093
        %1121 = vset.pattern.permute.xlu0 0
        %1122 = vperm.xlu0 %1121, %v1103
        %v1123 = vpop.permute.xlu0 %1122
        %v1125 = vperm.slane %v1123, 0
        %v1127 = vsel %vm667, %v1102, 0
        %1129 = vmatpush.bf16.msra.mxu0 0
        %1130 = vmatpush.bf16.msra.mxu0 0
        %1131 = vmatpush.bf16.msra.mxu0 0
        %1132 = vmatpush.bf16.msra.mxu0 0
        %1133 = vmatpush.bf16.msra.mxu0 0
        %1134 = vmatpush.bf16.msra.mxu0 0
        %1135 = vmatpush.bf16.msra.mxu0 %v1112
        %1136 = vmatpush.bf16.msra.mxu0 %v1104
        %1137 = vmatmul.bf16.gmra.mxu0 %v1127
        %v1138 = vpop.f32.mrf.mxu0
        %v1139 = vadd.f32 %v1125, %v1138
        %v1140 = vpop.f32.mrf.mxu0
        %1141 = vdwg.mxu0
        %1142 = vmatpush.bf16.msra.mxu0 0
        %1143 = vmatpush.bf16.msra.mxu0 0
        %1144 = vmatpush.bf16.msra.mxu0 0
        %1145 = vmatpush.bf16.msra.mxu0 0
        %1146 = vmatpush.bf16.msra.mxu0 0
        %1147 = vmatpush.bf16.msra.mxu0 0
        %1148 = vmatpush.bf16.msra.mxu0 %v1113
        %1149 = vmatpush.bf16.msra.mxu0 %v1105
        %1150 = vmatmul.bf16.gmra.mxu0 %v1127
        %v1151 = vpop.f32.mrf.mxu0
        %v1152 = vadd.f32 %v1125, %v1151
        %v1153 = vpop.f32.mrf.mxu0
        %1154 = vdwg.mxu0
        %1155 = vmatpush.bf16.msra.mxu0 0
        %1156 = vmatpush.bf16.msra.mxu0 0
        %1157 = vmatpush.bf16.msra.mxu0 0
        %1158 = vmatpush.bf16.msra.mxu0 0
        %1159 = vmatpush.bf16.msra.mxu0 0
        %1160 = vmatpush.bf16.msra.mxu0 0
        %1161 = vmatpush.bf16.msra.mxu0 %v1114
        %1162 = vmatpush.bf16.msra.mxu0 %v1106
        %1163 = vmatmul.bf16.gmra.mxu0 %v1127
        %v1164 = vpop.f32.mrf.mxu0
        %v1165 = vadd.f32 %v1125, %v1164
        %v1166 = vpop.f32.mrf.mxu0
        %1167 = vdwg.mxu0
        %1168 = vmatpush.bf16.msra.mxu0 0
        %1169 = vmatpush.bf16.msra.mxu0 0
        %1170 = vmatpush.bf16.msra.mxu0 0
        %1171 = vmatpush.bf16.msra.mxu0 0
        %1172 = vmatpush.bf16.msra.mxu0 0
        %1173 = vmatpush.bf16.msra.mxu0 0
        %1174 = vmatpush.bf16.msra.mxu0 %v1115
        %1175 = vmatpush.bf16.msra.mxu0 %v1107
        %1176 = vmatmul.bf16.gmra.mxu0 %v1127
        %v1177 = vpop.f32.mrf.mxu0
        %v1178 = vadd.f32 %v1125, %v1177
        %v1179 = vpop.f32.mrf.mxu0
        %1180 = vdwg.mxu0
        %1181 = vmatpush.bf16.msra.mxu0 0
        %1182 = vmatpush.bf16.msra.mxu0 0
        %1183 = vmatpush.bf16.msra.mxu0 0
        %1184 = vmatpush.bf16.msra.mxu0 0
        %1185 = vmatpush.bf16.msra.mxu0 0
        %1186 = vmatpush.bf16.msra.mxu0 0
        %1187 = vmatpush.bf16.msra.mxu0 %v1116
        %1188 = vmatpush.bf16.msra.mxu0 %v1108
        %1189 = vmatmul.bf16.gmra.mxu0 %v1127
        %v1190 = vpop.f32.mrf.mxu0
        %v1191 = vadd.f32 %v1125, %v1190
        %v1192 = vpop.f32.mrf.mxu0
        %1193 = vdwg.mxu0
        %1194 = vmatpush.bf16.msra.mxu0 0
        %1195 = vmatpush.bf16.msra.mxu0 0
        %1196 = vmatpush.bf16.msra.mxu0 0
        %1197 = vmatpush.bf16.msra.mxu0 0
        %1198 = vmatpush.bf16.msra.mxu0 0
        %1199 = vmatpush.bf16.msra.mxu0 0
        %1200 = vmatpush.bf16.msra.mxu0 %v1117
        %1201 = vmatpush.bf16.msra.mxu0 %v1109
        %1202 = vmatmul.bf16.gmra.mxu0 %v1127
        %v1203 = vpop.f32.mrf.mxu0
        %v1204 = vadd.f32 %v1125, %v1203
        %v1205 = vpop.f32.mrf.mxu0
        %1206 = vdwg.mxu0
        %1207 = vmatpush.bf16.msra.mxu0 0
        %1208 = vmatpush.bf16.msra.mxu0 0
        %1209 = vmatpush.bf16.msra.mxu0 0
        %1210 = vmatpush.bf16.msra.mxu0 0
        %1211 = vmatpush.bf16.msra.mxu0 0
        %1212 = vmatpush.bf16.msra.mxu0 0
        %1213 = vmatpush.bf16.msra.mxu0 %v1118
        %1214 = vmatpush.bf16.msra.mxu0 %v1110
        %1215 = vmatmul.bf16.gmra.mxu0 %v1127
        %v1216 = vpop.f32.mrf.mxu0
        %v1217 = vadd.f32 %v1125, %v1216
        %v1218 = vpop.f32.mrf.mxu0
        %1219 = vdwg.mxu0
        %1220 = vmatpush.bf16.msra.mxu0 0
        %1221 = vmatpush.bf16.msra.mxu0 0
        %1222 = vmatpush.bf16.msra.mxu0 0
        %1223 = vmatpush.bf16.msra.mxu0 0
        %1224 = vmatpush.bf16.msra.mxu0 0
        %1225 = vmatpush.bf16.msra.mxu0 0
        %1226 = vmatpush.bf16.msra.mxu0 %v1119
        %1227 = vmatpush.bf16.msra.mxu0 %v1111
        %1228 = vmatmul.bf16.gmra.mxu0 %v1127
        %v1229 = vpop.f32.mrf.mxu0
        %v1230 = vadd.f32 %v1125, %v1229
        %v1231 = vpop.f32.mrf.mxu0
        %1232 = vdwg.mxu0
        %v1241 = vrot.slane %v1152, 7
        %v1242 = vrot.slane %v1165, 6
        %v1243 = vrot.slane %v1178, 5
        %v1244 = vrot.slane %v1191, 4
        %v1245 = vrot.slane %v1204, 3
        %v1246 = vrot.slane %v1217, 2
        %v1247 = vrot.slane %v1230, 1
        %vm1248 = vcmask 1040384
        %v1249 = vsel %vm1248, %v1139, %v1241
        %vm1250 = vcmask 1042434
        %v1251 = vsel %vm1250, %v1242, %v1243
        %vm1252 = vcmask 1041408
        %v1253 = vsel %vm1252, %v1249, %v1251
        %vm1254 = vcmask 1044484
        %v1255 = vsel %vm1254, %v1244, %v1245
        %vm1256 = vcmask 1046534
        %v1257 = vsel %vm1256, %v1246, %v1247
        %vm1258 = vcmask 1045508
        %v1259 = vsel %vm1258, %v1255, %v1257
        %vm1260 = vcmask 1043456
        %v1261 = vsel %vm1260, %v1253, %v1259
        %1263 = vst [vmem:[%s328] sm:$0xff] %v1261
        %s1264 = sand.u32 %s227, 1
        %s1265 = scalar_lea.sflag [#allocation4], %s1264
        %s1266 = sand.u32 %s227, 1
        %s1267 = smul.addr %s1266, 8
        %s1268 = scalar_lea.vmem [#allocation3], %s1267
        // Predicated region
        $region57: #{tpu_custom_call.1} parent=55 // pred_check
          %p1269 = pneg %p237
        $region58: #{tpu_custom_call.1} parent=55 // pred_check_branch
          %1271 = sbr.rel (%p1269) target = $region60
        $region59: #{tpu_custom_call.1} parent=55 // pred_region
          %s1272 = smul.u32 8, %s25
          %1274 = vsyncadd %s1265, 0
          %s1275 = scalar_lea.hbm %s9, %s1272
          %s1277 = sshll.u32 %s1268, 4
          %s1278 = int_to_ptr.vmem [resolvable:$true] %s1277
          %s1279 = sshll.u32 %s1275, 4
          %s1280 = int_to_ptr.hbm [resolvable:$true] %s1279
          %1282 = dma.vmem_to_hbm [thread:$0]  %s1278, 128, %s1280, %s1265
        $region60: #{tpu_custom_call.1} parent=55 // pred_fallthru
          _
      $region56: #{tpu_custom_call.1} parent=5 // pred_fallthru
        _
      %p1283 = scmp.le.s32.totalorder 2, %s20
      // Predicated region
      $region61: #{tpu_custom_call.1} parent=5 // pred_check
        %p1284 = pneg %p1283
      $region62: #{tpu_custom_call.1} parent=5 // pred_check_branch
        %1286 = sbr.rel (%p1284) target = $region64
      $region63: #{tpu_custom_call.1} parent=5 // pred_region
        %s1287 = ssub.s32 %s20, 2
        // Predicated region
        $region65: #{tpu_custom_call.1} parent=63 // pred_check
          %p1288 = pneg %p243
        $region66: #{tpu_custom_call.1} parent=63 // pred_check_branch
          %1290 = sbr.rel (%p1288) target = $region68
        $region67: #{tpu_custom_call.1} parent=63 // pred_region
          %s1291 = sand.u32 %s228, 1
          %s1292 = scalar_lea.sflag [#allocation4], %s1291
          %s1293 = sand.u32 %s228, 1
          %s1294 = smul.addr %s1293, 8
          %s1295 = scalar_lea.vmem [#allocation3], %s1294
          %1297 = dma.done %s1292, 128
        $region68: #{tpu_custom_call.1} parent=63 // pred_fallthru
          _
      $region64: #{tpu_custom_call.1} parent=5 // pred_fallthru
        _
    $region6: #{tpu_custom_call.1} parent=1 // loop_footer
      %s24 = sadd.s32 1, %s20
    $region7: #{tpu_custom_call.1} parent=1 // loop_footer_branch
      %19 = sbr.rel target = $region3
    $region8: #{tpu_custom_call.1} parent=1 // loop_exit
      _
    %1298 = vsyncpa [#allocation4], 1
    %s1299 = scalar_lea.sflag [#allocation4], 1
    %1300 = vsyncpa %s1299, 1

</llo_original>
